<compile_context>
chip_gen: v7x
topology: tpu7x:2x2x1
jax: 0.10.0
libtpu: 0.0.40
codegen_flags: <defaults>
</compile_context>

<pallas_src>
import jax
import jax.numpy as jnp
from jax import lax
from jax.experimental import pallas as pl
from jax.experimental.pallas import tpu as pltpu


def _ensemble_mean_kernel(x_ref, w_ref, b_ref, o_ref):
    # x_ref: (TM, D_IN)      batch tile
    # w_ref: (D_OUT, D_IN)   ensemble-mean weight, PyTorch Linear layout (resident)
    # b_ref: (1, D_OUT)      ensemble-mean bias, f32 (resident)
    # o_ref: (TM, D_OUT)
    # Contract the last dim of both operands directly (no `.T`, so no XLU
    # relayout); accumulate in f32 on the MXU regardless of input dtype.
    y = lax.dot_general(
        x_ref[...], w_ref[...],
        dimension_numbers=(((1,), (1,)), ((), ())),
        preferred_element_type=jnp.float32,
    )  # (TM, D_OUT), lane-dense output
    o_ref[...] = (y + b_ref[...]).astype(o_ref.dtype)


def ensemble_mean_forward(x, weights, biases, *, tm=None, compute_dtype=None):
    """x: [B, D_IN], weights: [E, D_OUT, D_IN], biases: [E, D_OUT] -> [B, D_OUT]."""
    B, D_IN = x.shape
    E, D_OUT, _ = weights.shape
    out_dtype = x.dtype

    # Algebraic fold (trivial wrapper-side XLA ops): linear members => the
    # ensemble mean is exactly one Linear with averaged parameters.
    w_mean = jnp.mean(weights.astype(jnp.float32), axis=0)                 # (D_OUT, D_IN)
    b_mean = jnp.mean(biases.astype(jnp.float32), axis=0).reshape(1, D_OUT)

    # Optional low-precision activations/weights (production: bf16); f32
    # accumulation is preserved inside the kernel via preferred_element_type.
    if compute_dtype is not None:
        x = x.astype(compute_dtype)
        w_mean = w_mean.astype(compute_dtype)

    # Batch tiling: cap tiles at 256 rows (multiple of 8, ~85%-of-roofline
    # sweet spot); pl.cdiv handles any ragged final tile.  Multiple grid steps
    # let the "parallel" axis shard across both TensorCores on v7x.
    if tm is None:
        tm = B if B <= 256 else 256
    tm = min(tm, B)
    grid = (pl.cdiv(B, tm),)

    # Explicit VMEM budget: resident params + double-buffered x/out tiles with
    # headroom; clamp so it also fits v7x's 64 MiB physical VMEM.
    in_itemsize = jnp.dtype(x.dtype).itemsize
    out_itemsize = jnp.dtype(out_dtype).itemsize
    resident = D_OUT * D_IN * in_itemsize + D_OUT * 4
    tiles = 2 * (tm * D_IN * in_itemsize + tm * D_OUT * out_itemsize)
    vmem_limit = min(max(int(resident + tiles) + (4 << 20), 32 << 20), 56 << 20)

    cost = pl.CostEstimate(
        flops=2 * B * D_OUT * D_IN,
        transcendentals=0,
        bytes_accessed=int(
            B * D_IN * in_itemsize            # x
            + D_OUT * D_IN * in_itemsize      # folded weights
            + D_OUT * 4                       # folded bias
            + B * D_OUT * out_itemsize        # output
        ),
    )

    # TODO(synk): at production shapes, pad D_OUT to a multiple of 128 in the
    # wrapper (lane-dense stores) and, for large D_IN, add a K-reduction grid
    # axis (tk multiple of 256 on v6e/v7x, 128 on v5e) with a pl.when-init
    # f32 accumulator so only a (D_OUT, tk) weight tile is resident.
    return pl.pallas_call(
        _ensemble_mean_kernel,
        out_shape=jax.ShapeDtypeStruct((B, D_OUT), out_dtype),
        grid_spec=pltpu.PrefetchScalarGridSpec(
            num_scalar_prefetch=0,
            grid=grid,
            in_specs=[
                pl.BlockSpec((tm, D_IN), lambda i: (i, 0)),      # x batch tile
                pl.BlockSpec((D_OUT, D_IN), lambda i: (0, 0)),   # mean weight (resident)
                pl.BlockSpec((1, D_OUT), lambda i: (0, 0)),      # mean bias (resident)
            ],
            out_specs=pl.BlockSpec((tm, D_OUT), lambda i: (i, 0)),
        ),
        compiler_params=pltpu.CompilerParams(
            dimension_semantics=("parallel",),   # batch axis; shards over 2 TCs on v7x
            vmem_limit_bytes=vmem_limit,
        ),
        cost_estimate=cost,
    )(x, w_mean, b_mean)


if __name__ == "__main__":
    # Small, deterministic problem: ensemble of 4 Linear(32 -> 32) members,
    # batch of 8 inputs.
    E, B, D_IN, D_OUT = 4, 8, 32, 32

    key = jax.random.PRNGKey(0)
    kx, kw, kb = jax.random.split(key, 3)
    x = jax.random.normal(kx, (B, D_IN), dtype=jnp.float32)
    weights = jax.random.normal(kw, (E, D_OUT, D_IN), dtype=jnp.float32) * 0.1
    biases = jax.random.normal(kb, (E, D_OUT), dtype=jnp.float32) * 0.1

    # Pure-JAX reference of the PyTorch semantics:
    # stack([x @ W_e.T + b_e for e in range(E)]).mean(axis=0)
    ref = jnp.mean(
        jnp.einsum("bi,eoi->ebo", x, weights) + biases[:, None, :], axis=0
    )

    # f32 path (exact up to fp summation order).
    out = jax.block_until_ready(ensemble_mean_forward(x, weights, biases))
    assert out.shape == (B, D_OUT)
    assert jnp.allclose(out, ref, atol=1e-5, rtol=1e-5), "f32 mismatch vs reference"

    # bf16 activations/weights, f32 accumulation (production path).
    out_bf16 = jax.block_until_ready(
        ensemble_mean_forward(x, weights, biases, compute_dtype=jnp.bfloat16)
    )
    assert jnp.allclose(out_bf16.astype(jnp.float32), ref, atol=3e-2, rtol=3e-2), \
        "bf16 mismatch vs reference"

    print("KERNEL_OK")
</pallas_src>

<mosaic_0001>
module attributes {stable_mosaic.version = 11 : i64} {
  func.func @_ensemble_mean_kernel(%arg0: i32, %arg1: memref<8x32xf32, #tpu.memory_space<vmem>>, %arg2: memref<32x32xf32, #tpu.memory_space<vmem>>, %arg3: memref<1x32xf32, #tpu.memory_space<vmem>>, %arg4: memref<8x32xf32, #tpu.memory_space<vmem>>) attributes {dimension_semantics = [#tpu.dimension_semantics<parallel>], iteration_bounds = array<i64: 1>, scalar_prefetch = 0 : i64, scratch_operands = 0 : i64, tpu.core_type = #tpu.core_type<tc>, window_params = [{transform_indices = @transform_0, window_bounds = array<i64: 8, 32>}, {pipeline_mode = #tpu.pipeline_mode<synchronous>, transform_indices = @transform_1, window_bounds = array<i64: 32, 32>}, {pipeline_mode = #tpu.pipeline_mode<synchronous>, transform_indices = @transform_2, window_bounds = array<i64: 1, 32>}, {transform_indices = @transform_3, window_bounds = array<i64: 8, 32>}]} {
    %c0 = arith.constant 0 : index
    %c0_0 = arith.constant 0 : index
    %0 = vector.load %arg1[%c0, %c0_0] : memref<8x32xf32, #tpu.memory_space<vmem>>, vector<8x32xf32>
    %c0_1 = arith.constant 0 : index
    %c0_2 = arith.constant 0 : index
    %1 = vector.load %arg2[%c0_1, %c0_2] : memref<32x32xf32, #tpu.memory_space<vmem>>, vector<32x32xf32>
    %cst = arith.constant dense<0.000000e+00> : vector<8x32xf32>
    %2 = tpu.matmul %0, %1, %cst {dimension_numbers = #tpu.dot_dimension_numbers<[1], [1], [0], [0], [0, 0, 1, 0], [], []>} : vector<8x32xf32>, vector<32x32xf32>, vector<8x32xf32> -> vector<8x32xf32>
    %c0_3 = arith.constant 0 : index
    %c0_4 = arith.constant 0 : index
    %3 = vector.load %arg3[%c0_3, %c0_4] : memref<1x32xf32, #tpu.memory_space<vmem>>, vector<1x32xf32>
    %4 = vector.broadcast %3 : vector<1x32xf32> to vector<8x32xf32>
    %5 = arith.addf %2, %4 : vector<8x32xf32>
    %c0_5 = arith.constant 0 : index
    %c0_6 = arith.constant 0 : index
    %6 = vector.load %arg4[%c0_5, %c0_6] : memref<8x32xf32, #tpu.memory_space<vmem>>, vector<8x32xf32>
    tpu.vector_store %arg4[%c0_5, %c0_6], %5 {strides = array<i32>} : memref<8x32xf32, #tpu.memory_space<vmem>>, vector<8x32xf32>,
    return
  }
  func.func @transform_0(%arg0: i32) -> (i32, i32) {
    %c0_i32 = arith.constant 0 : i32
    %c0_i32_0 = arith.constant 0 : i32
    return %arg0, %c0_i32 : i32, i32
  }
  func.func @transform_1(%arg0: i32) -> (i32, i32) {
    %c0_i32 = arith.constant 0 : i32
    %c0_i32_0 = arith.constant 0 : i32
    %c0_i32_1 = arith.constant 0 : i32
    return %c0_i32, %c0_i32_0 : i32, i32
  }
  func.func @transform_2(%arg0: i32) -> (i32, i32) {
    %c0_i32 = arith.constant 0 : i32
    %c0_i32_0 = arith.constant 0 : i32
    %c0_i32_1 = arith.constant 0 : i32
    return %c0_i32, %c0_i32_0 : i32, i32
  }
  func.func @transform_3(%arg0: i32) -> (i32, i32) {
    %c0_i32 = arith.constant 0 : i32
    %c0_i32_0 = arith.constant 0 : i32
    return %arg0, %c0_i32 : i32, i32
  }
}

</mosaic_0001>

<llo_original>
// kernel: tpu_custom_call.1
$region0: #{tpu_custom_call.1}
  #allocation0 [shape = 'u32[]', space=smem, size = 0x4, offset = 0x4, fixed_abs, tag = 'smem constant byte address 0x4 - core index']
  #allocation1 [shape = 'u32[144,128]{1,0:T(1,128)}', space=vmem, size = 0x12000, scoped, tag = 'internal scratch']
  %s0 = inlined_call_operand.hbm [shape: f32[8,32], index: 0, kind: input, shape index: {}]
  %s1 = inlined_call_operand.hbm [shape: f32[32,32], index: 1, kind: input, shape index: {}]
  %s2 = inlined_call_operand.vmem [shape: f32[1,32], index: 2, kind: input, shape index: {}]
  %s3 = inlined_call_operand.hbm [shape: f32[8,32], index: 3, kind: output, shape index: {}]
  %s4 = sld [smem:[#allocation0]]
  $region30: #{tpu_custom_call.1} parent=0
    _
  %s6 = ssub.s32 1, %s4
  %s7 = scalar_select 0, %s6, %s4
  $region1: #{tpu_custom_call.1} parent=0
    #allocation2 [shape = 'u8[4096]{0}', space=vmem, size = 0x1000, scoped, tag = 'input window, operand 0, single buffered']
    #allocation3 [shape = 's32[1]{0}', space=sflag, size = 0x4, scoped, tag = 'scoped memory for tpu_custom_call.1']
    #allocation4 [shape = 's32[1]{0}', space=sflag, size = 0x4, scoped, tag = 'scoped memory for tpu_custom_call.1']
    #allocation5 [shape = 'u8[16384]{0}', space=vmem, size = 0x4000, scoped, tag = 'input window, operand 1, single buffered']
    #allocation6 [shape = 's32[1]{0}', space=sflag, size = 0x4, scoped, tag = 'scoped memory for tpu_custom_call.1']
    #allocation7 [shape = 'u8[4096]{0}', space=vmem, size = 0x1000, scoped, tag = 'output window, operand 0, single buffered']
    %8 = vsyncpa [#allocation3], 0
    %9 = vsyncpa [#allocation6], 0
    %10 = vsyncpa [#allocation4], 0
    // Predicated region
    $region2: #{tpu_custom_call.1} parent=1 // pred_check
      _
    $region3: #{tpu_custom_call.1} parent=1 // pred_check_branch
      %12 = sbr.rel (0) target = $region5
    $region4: #{tpu_custom_call.1} parent=1 // pred_region
      %s14 = ssub.s32 128, 128
      %15 = vsyncadd [#allocation3], %s14
      %s17 = sshll.u32 [#allocation2], 4
      %s18 = int_to_ptr.vmem [resolvable:$true] %s17
      %20 = dma.hbm_to_vmem [thread:$0]  %s0, 128, %s18, [#allocation3]
    $region5: #{tpu_custom_call.1} parent=1 // pred_fallthru
      _
    // Predicated region
    $region6: #{tpu_custom_call.1} parent=1 // pred_check
      _
    $region7: #{tpu_custom_call.1} parent=1 // pred_check_branch
      %22 = sbr.rel (0) target = $region9
    $region8: #{tpu_custom_call.1} parent=1 // pred_region
      %s24 = ssub.s32 512, 512
      %25 = vsyncadd [#allocation6], %s24
      %s26 = sshll.u32 [#allocation5], 4
      %s27 = int_to_ptr.vmem [resolvable:$true] %s26
      %32 = dma.hbm_to_vmem [thread:$0]  %s1, 512, %s27, [#allocation6], 128, 128, 8
    $region9: #{tpu_custom_call.1} parent=1 // pred_fallthru
      _
    // Predicated region
    $region10: #{tpu_custom_call.1} parent=1 // pred_check
      _
    $region11: #{tpu_custom_call.1} parent=1 // pred_check_branch
      %34 = sbr.rel (0) target = $region13
    $region12: #{tpu_custom_call.1} parent=1 // pred_region
      _
    $region13: #{tpu_custom_call.1} parent=1 // pred_fallthru
      _
    // Predicated region
    $region14: #{tpu_custom_call.1} parent=1 // pred_check
      _
    $region15: #{tpu_custom_call.1} parent=1 // pred_check_branch
      %36 = sbr.rel (0) target = $region17
    $region16: #{tpu_custom_call.1} parent=1 // pred_region
      %37 = dma.done [#allocation3], 128
    $region17: #{tpu_custom_call.1} parent=1 // pred_fallthru
      _
    // Predicated region
    $region18: #{tpu_custom_call.1} parent=1 // pred_check
      _
    $region19: #{tpu_custom_call.1} parent=1 // pred_check_branch
      %39 = sbr.rel (0) target = $region21
    $region20: #{tpu_custom_call.1} parent=1 // pred_region
      %40 = dma.done [#allocation6], 512
    $region21: #{tpu_custom_call.1} parent=1 // pred_fallthru
      _
    %v41 = vld [vmem:[#allocation2] sm:$0xff]
    %v42 = vld [vmem:[#allocation5] sm:$0xff]
    %v43 = vld [vmem:[#allocation5 + $0x8] sm:$0xff]
    %v44 = vld [vmem:[#allocation5 + $0x10] sm:$0xff]
    %v45 = vld [vmem:[#allocation5 + $0x18] sm:$0xff]
    %v46 = vld [vmem:[%s2] sm:$0x1]
    %v48 = vlaneseq
    %v49 = vshrl.u32 %v48, 7
    %v50 = vsub.s32 0, %v49
    %v51 = vrot.slane %v46, %v50
    %vm53 = vcmask 261120
    %v55 = vsel %vm53, %v41, 0
    %v58 = vsel %vm53, %v42, 0
    %v61 = vsel %vm53, %v43, 0
    %v64 = vsel %vm53, %v44, 0
    %v67 = vsel %vm53, %v45, 0
    %69 = vmatprep.subr.mxu0 0.0
    %70 = vmatpush1.xpose.msra.mxu0 %v58
    %71 = vmatprep.subr.mxu0 0.0
    %72 = vmatpush1.xpose.msra.mxu0 %v61
    %73 = vmatprep.subr.mxu0 0.0
    %74 = vmatpush1.xpose.msra.mxu0 %v64
    %75 = vmatprep.subr.mxu0 0.0
    %76 = vmatpush1.xpose.msra.mxu0 %v67
    %77 = vmatprep.subr.mxu0 0.0
    %78 = vmatpush1.xpose.msra.mxu0 0.0
    %79 = vmatprep.subr.mxu0 0.0
    %80 = vmatpush1.xpose.msra.mxu0 0.0
    %81 = vmatprep.subr.mxu0 0.0
    %82 = vmatpush1.xpose.msra.mxu0 0.0
    %83 = vmatprep.subr.mxu0 0.0
    %84 = vmatpush1.xpose.msra.mxu0 0.0
    %85 = vmatprep.subr.mxu0 0.0
    %86 = vmatpush1.xpose.msra.mxu0 0.0
    %87 = vmatprep.subr.mxu0 0.0
    %88 = vmatpush1.xpose.msra.mxu0 0.0
    %89 = vmatprep.subr.mxu0 0.0
    %90 = vmatpush1.xpose.msra.mxu0 0.0
    %91 = vmatprep.subr.mxu0 0.0
    %92 = vmatpush1.xpose.msra.mxu0 0.0
    %93 = vmatprep.subr.mxu0 0.0
    %94 = vmatpush1.xpose.msra.mxu0 0.0
    %95 = vmatprep.subr.mxu0 0.0
    %96 = vmatpush1.xpose.msra.mxu0 0.0
    %97 = vmatprep.subr.mxu0 0.0
    %98 = vmatpush1.xpose.msra.mxu0 0.0
    %99 = vmatprep.subr.mxu0 0.0
    %100 = vmatpush1.xpose.msra.mxu0 0.0
    %101 = vmatprep.subr.mxu0 0.0
    %102 = vmatpush1.xpose.msra.mxu0 0.0
    %103 = vmatprep.subr.mxu0 0.0
    %104 = vmatpush1.xpose.msra.mxu0 0.0
    %105 = vmatprep.subr.mxu0 0.0
    %106 = vmatpush1.xpose.msra.mxu0 0.0
    %107 = vmatprep.subr.mxu0 0.0
    %108 = vmatpush1.xpose.msra.mxu0 0.0
    %109 = vmatprep.subr.mxu0 0.0
    %110 = vmatpush1.xpose.msra.mxu0 0.0
    %111 = vmatprep.subr.mxu0 0.0
    %112 = vmatpush1.xpose.msra.mxu0 0.0
    %113 = vmatprep.subr.mxu0 0.0
    %114 = vmatpush1.xpose.msra.mxu0 0.0
    %115 = vmatprep.subr.mxu0 0.0
    %116 = vmatpush1.xpose.msra.mxu0 0.0
    %117 = vmatprep.subr.mxu0 0.0
    %118 = vmatpush1.xpose.msra.mxu0 0.0
    %119 = vmatprep.subr.mxu0 0.0
    %120 = vmatpush1.xpose.msra.mxu0 0.0
    %121 = vmatprep.subr.mxu0 0.0
    %122 = vmatpush1.xpose.msra.mxu0 0.0
    %123 = vmatprep.subr.mxu0 0.0
    %124 = vmatpush1.xpose.msra.mxu0 0.0
    %125 = vmatprep.subr.mxu0 0.0
    %126 = vmatpush1.xpose.msra.mxu0 0.0
    %127 = vmatprep.subr.mxu0 0.0
    %128 = vmatpush1.xpose.msra.mxu0 0.0
    %129 = vmatprep.subr.mxu0 0.0
    %130 = vmatpush1.xpose.msra.mxu0 0.0
    %131 = vmatprep.subr.mxu0 0.0
    %132 = vmatpush1.xpose.msra.mxu0 0.0
    %133 = vmatprep.mubr.f32.mxu0 0.0
    %134 = vmatmul.mubr.f32.gmra.mrb[0].mxu0 %v55
    %v135 = vpop.f32.mrb[0].mxu0
    %v136 = vadd.f32 %v51, %v135
    %v137 = vpop.f32.mrb[0].mxu0
    %138 = vdwg.mxu0
    %139 = vst.msk [vmem:[#allocation7] sm:$0xff] %vm53, %v136
    // Predicated region
    $region22: #{tpu_custom_call.1} parent=1 // pred_check
      _
    $region23: #{tpu_custom_call.1} parent=1 // pred_check_branch
      %141 = sbr.rel (0) target = $region25
    $region24: #{tpu_custom_call.1} parent=1 // pred_region
      %s143 = ssub.s32 128, 128
      %144 = vsyncadd [#allocation4], %s143
      %s146 = sshll.u32 [#allocation7], 4
      %s147 = int_to_ptr.vmem [resolvable:$true] %s146
      %149 = dma.vmem_to_hbm [thread:$0]  %s147, 128, %s3, [#allocation4]
    $region25: #{tpu_custom_call.1} parent=1 // pred_fallthru
      _
    // Predicated region
    $region26: #{tpu_custom_call.1} parent=1 // pred_check
      _
    $region27: #{tpu_custom_call.1} parent=1 // pred_check_branch
      %151 = sbr.rel (0) target = $region29
    $region28: #{tpu_custom_call.1} parent=1 // pred_region
      %152 = dma.done [#allocation4], 128
    $region29: #{tpu_custom_call.1} parent=1 // pred_fallthru
      _
    %153 = vsyncpa [#allocation3], 1
    %154 = vsyncpa [#allocation6], 1
    %155 = vsyncpa [#allocation4], 1

</llo_original>
